<compile_context>
chip_gen: v7x
topology: tpu7x:2x2x1
jax: 0.10.0
libtpu: 0.0.40
codegen_flags: <defaults>
</compile_context>

<pallas_src>
import jax
import jax.numpy as jnp
from jax.experimental import pallas as pl
from jax.experimental.pallas import tpu as pltpu


def _round_up(x, m):
    return ((x + m - 1) // m) * m


def le_conv_kernel(src_ref, comm_ref, w12_ref, w3r_ref, o_ref):
    # src_ref:  [TN, D_in]        source node embeddings tile
    # comm_ref: [TN, C*D_in]      flattened community embeddings tile
    # w12_ref:  [D_in, D_out]     W1^T + C*W2^T  (folded in wrapper)
    # w3r_ref:  [C*D_in, D_out]   W3^T stacked C times (K-reduction over C)
    s = jnp.dot(src_ref[...], w12_ref[...], preferred_element_type=jnp.float32)
    c = jnp.dot(comm_ref[...], w3r_ref[...], preferred_element_type=jnp.float32)
    o_ref[...] = (s - c).astype(o_ref.dtype)


def le_conv(src, comm, w1, w2, w3, *, tile_n=512):
    """src: [N, D_in], comm: [N, C, D_in], w*: [D_out, D_in] (PyTorch layout)."""
    n, d_in = src.shape
    _, c, _ = comm.shape
    d_out = w1.shape[0]

    # --- Wrapper-side weight prep (exact algebraic identities) ---------------
    w12 = (w1.T + jnp.asarray(float(c), w2.dtype) * w2.T)       # [D_in, D_out]
    w3_rep = jnp.concatenate([w3.T] * c, axis=0)                 # [C*D_in, D_out]
    comm2d = comm.reshape(n, c * d_in)                           # lane-dense K

    # --- Tile-size selection --------------------------------------------------
    bytes_per_elt = jnp.dtype(src.dtype).itemsize
    # double-buffered per-step footprint per row: src + flattened comm + out
    row_bytes = 2 * bytes_per_elt * (d_in + c * d_in + d_out)
    vmem_budget = 24 * 1024 * 1024  # stay well under the 32 MiB scoped default
    max_rows_vmem = max(8, (vmem_budget // max(row_bytes, 1)) // 8 * 8)
    tile_n = min(tile_n, max_rows_vmem)
    if n > 8:
        # keep >=2 grid steps when possible so both v7x TensorCores get work
        tile_n = min(tile_n, _round_up(pl.cdiv(n, 2), 8))
    tile_n = max(8, _round_up(tile_n, 8))

    n_pad = _round_up(n, tile_n)
    if n_pad != n:
        src = jnp.pad(src, ((0, n_pad - n), (0, 0)))
        comm2d = jnp.pad(comm2d, ((0, n_pad - n), (0, 0)))

    grid = (n_pad // tile_n,)

    flops = 2 * n * d_out * (d_in + c * d_in)
    bytes_accessed = bytes_per_elt * (
        n * d_in + n * c * d_in + n * d_out + d_in * d_out + c * d_in * d_out
    )

    out = pl.pallas_call(
        le_conv_kernel,
        out_shape=jax.ShapeDtypeStruct((n_pad, d_out), src.dtype),
        grid_spec=pltpu.PrefetchScalarGridSpec(
            num_scalar_prefetch=0,
            grid=grid,
            in_specs=[
                pl.BlockSpec((tile_n, d_in), lambda i: (i, 0)),
                pl.BlockSpec((tile_n, c * d_in), lambda i: (i, 0)),
                pl.BlockSpec((d_in, d_out), lambda i: (0, 0)),
                pl.BlockSpec((c * d_in, d_out), lambda i: (0, 0)),
            ],
            out_specs=pl.BlockSpec((tile_n, d_out), lambda i: (i, 0)),
        ),
        compiler_params=pltpu.CompilerParams(
            dimension_semantics=("parallel",),
        ),
        cost_estimate=pl.CostEstimate(
            flops=flops, transcendentals=0, bytes_accessed=bytes_accessed
        ),
    )(src, comm2d, w12, w3_rep)

    return out[:n]
    # TODO(synk): if D_out stays small (<128) at large N, pad the output lane
    # dim to 128 at the pallas_call boundary to avoid masked partial stores.


def le_conv_reference(src, comm, w1, w2, w3):
    """Pure-JAX reference matching the PyTorch forward exactly."""
    n = src.shape[0]
    d_out = w1.shape[0]
    src_score = src @ w1.T
    src_score1 = src @ w2.T
    comm_flat = comm.reshape(-1, comm.shape[-1])
    comm_scores = (comm_flat @ w3.T).reshape(n, -1, d_out)
    community_score = jnp.sum(src_score1[:, None, :] - comm_scores, axis=1)
    return src_score + community_score


if __name__ == "__main__":
    # Small shapes consistent with the module's forward:
    #   N nodes, C community members per node, in_channels -> out_channels.
    N, C, IN_CH, OUT_CH = 16, 4, 32, 32

    key = jax.random.PRNGKey(0)
    k_src, k_comm, k_w1, k_w2, k_w3 = jax.random.split(key, 5)

    src = jax.random.normal(k_src, (N, IN_CH), dtype=jnp.float32)
    comm = jax.random.normal(k_comm, (N, C, IN_CH), dtype=jnp.float32)

    # Deterministic parameter init mimicking nn.Linear.reset_parameters()
    # (kaiming-uniform: U(-1/sqrt(in), 1/sqrt(in))), weights have shape [out, in].
    bound = 1.0 / (IN_CH ** 0.5)
    w1 = jax.random.uniform(k_w1, (OUT_CH, IN_CH), jnp.float32, -bound, bound)
    w2 = jax.random.uniform(k_w2, (OUT_CH, IN_CH), jnp.float32, -bound, bound)
    w3 = jax.random.uniform(k_w3, (OUT_CH, IN_CH), jnp.float32, -bound, bound)

    out = le_conv(src, comm, w1, w2, w3)
    out = jax.block_until_ready(out)

    ref = le_conv_reference(src, comm, w1, w2, w3)
    assert out.shape == (N, OUT_CH)
    assert jnp.allclose(out, ref, atol=1e-4, rtol=1e-4), "mismatch vs reference"

    print("KERNEL_OK")
</pallas_src>

<mosaic_0001>
module attributes {stable_mosaic.version = 11 : i64} {
  func.func @le_conv_kernel(%arg0: i32, %arg1: memref<8x32xf32, #tpu.memory_space<vmem>>, %arg2: memref<8x128xf32, #tpu.memory_space<vmem>>, %arg3: memref<32x32xf32, #tpu.memory_space<vmem>>, %arg4: memref<128x32xf32, #tpu.memory_space<vmem>>, %arg5: memref<8x32xf32, #tpu.memory_space<vmem>>) attributes {dimension_semantics = [#tpu.dimension_semantics<parallel>], iteration_bounds = array<i64: 2>, scalar_prefetch = 0 : i64, scratch_operands = 0 : i64, tpu.core_type = #tpu.core_type<tc>, window_params = [{transform_indices = @transform_0, window_bounds = array<i64: 8, 32>}, {transform_indices = @transform_1, window_bounds = array<i64: 8, 128>}, {pipeline_mode = #tpu.pipeline_mode<synchronous>, transform_indices = @transform_2, window_bounds = array<i64: 32, 32>}, {pipeline_mode = #tpu.pipeline_mode<synchronous>, transform_indices = @transform_3, window_bounds = array<i64: 128, 32>}, {transform_indices = @transform_4, window_bounds = array<i64: 8, 32>}]} {
    %c0 = arith.constant 0 : index
    %c0_0 = arith.constant 0 : index
    %0 = vector.load %arg1[%c0, %c0_0] : memref<8x32xf32, #tpu.memory_space<vmem>>, vector<8x32xf32>
    %c0_1 = arith.constant 0 : index
    %c0_2 = arith.constant 0 : index
    %1 = vector.load %arg3[%c0_1, %c0_2] : memref<32x32xf32, #tpu.memory_space<vmem>>, vector<32x32xf32>
    %cst = arith.constant dense<0.000000e+00> : vector<8x32xf32>
    %2 = tpu.matmul %0, %1, %cst {dimension_numbers = #tpu.dot_dimension_numbers<[1], [0], [0], [1], [0, 0, 1, 1], [], []>} : vector<8x32xf32>, vector<32x32xf32>, vector<8x32xf32> -> vector<8x32xf32>
    %c0_3 = arith.constant 0 : index
    %c0_4 = arith.constant 0 : index
    %3 = vector.load %arg2[%c0_3, %c0_4] : memref<8x128xf32, #tpu.memory_space<vmem>>, vector<8x128xf32>
    %c0_5 = arith.constant 0 : index
    %c0_6 = arith.constant 0 : index
    %4 = vector.load %arg4[%c0_5, %c0_6] : memref<128x32xf32, #tpu.memory_space<vmem>>, vector<128x32xf32>
    %cst_7 = arith.constant dense<0.000000e+00> : vector<8x32xf32>
    %5 = tpu.matmul %3, %4, %cst_7 {dimension_numbers = #tpu.dot_dimension_numbers<[1], [0], [0], [1], [0, 0, 1, 1], [], []>} : vector<8x128xf32>, vector<128x32xf32>, vector<8x32xf32> -> vector<8x32xf32>
    %6 = arith.subf %2, %5 : vector<8x32xf32>
    %c0_8 = arith.constant 0 : index
    %c0_9 = arith.constant 0 : index
    %7 = vector.load %arg5[%c0_8, %c0_9] : memref<8x32xf32, #tpu.memory_space<vmem>>, vector<8x32xf32>
    tpu.vector_store %arg5[%c0_8, %c0_9], %6 {strides = array<i32>} : memref<8x32xf32, #tpu.memory_space<vmem>>, vector<8x32xf32>,
    return
  }
  func.func @transform_0(%arg0: i32) -> (i32, i32) {
    %c0_i32 = arith.constant 0 : i32
    %c0_i32_0 = arith.constant 0 : i32
    return %arg0, %c0_i32 : i32, i32
  }
  func.func @transform_1(%arg0: i32) -> (i32, i32) {
    %c0_i32 = arith.constant 0 : i32
    %c0_i32_0 = arith.constant 0 : i32
    return %arg0, %c0_i32 : i32, i32
  }
  func.func @transform_2(%arg0: i32) -> (i32, i32) {
    %c0_i32 = arith.constant 0 : i32
    %c0_i32_0 = arith.constant 0 : i32
    %c0_i32_1 = arith.constant 0 : i32
    return %c0_i32, %c0_i32_0 : i32, i32
  }
  func.func @transform_3(%arg0: i32) -> (i32, i32) {
    %c0_i32 = arith.constant 0 : i32
    %c0_i32_0 = arith.constant 0 : i32
    %c0_i32_1 = arith.constant 0 : i32
    return %c0_i32, %c0_i32_0 : i32, i32
  }
  func.func @transform_4(%arg0: i32) -> (i32, i32) {
    %c0_i32 = arith.constant 0 : i32
    %c0_i32_0 = arith.constant 0 : i32
    return %arg0, %c0_i32 : i32, i32
  }
}

</mosaic_0001>

<llo_original>
// kernel: tpu_custom_call.1
$region0: #{tpu_custom_call.1}
  #allocation0 [shape = 'u32[]', space=smem, size = 0x4, offset = 0x4, fixed_abs, tag = 'smem constant byte address 0x4 - core index']
  #allocation1 [shape = 'u32[144,128]{1,0:T(1,128)}', space=vmem, size = 0x12000, scoped, tag = 'internal scratch']
  %s0 = inlined_call_operand.vmem [shape: f32[16,32], index: 0, kind: input, shape index: {}]
  %s1 = inlined_call_operand.vmem [shape: f32[16,128], index: 1, kind: input, shape index: {}]
  %s2 = inlined_call_operand.vmem [shape: f32[32,32], index: 2, kind: input, shape index: {}]
  %s3 = inlined_call_operand.vmem [shape: f32[128,32], index: 3, kind: input, shape index: {}]
  %s4 = inlined_call_operand.hbm [shape: f32[16,32], index: 4, kind: output, shape index: {}]
  %s5 = sld [smem:[#allocation0]]
  $region49: #{tpu_custom_call.1} parent=0
    _
  %s7 = ssub.s32 1, %s5
  %s8 = scalar_select 0, %s7, %s5
  $region1: #{tpu_custom_call.1} parent=0
    #allocation2 [shape = 'u8[8192]{0}', space=vmem, size = 0x2000, scoped, tag = 'output window, operand 0']
    #allocation3 [shape = 's32[2]{0}', space=sflag, size = 0x8, scoped, tag = 'scoped memory for tpu_custom_call.1']
    %9 = vsyncpa [#allocation3], 0
    %s10 = scalar_lea.sflag [#allocation3], 1
    %11 = vsyncpa %s10, 0
    loop: start=0, step=1, limit=4
    $region2: #{tpu_custom_call.1} parent=1 // loop_pre_header
      _
    $region3: #{tpu_custom_call.1} parent=1 // loop_header
      %s13 = sphi 0, %s17
      %p14 = scmp.ge.s32.totalorder %s13, 4
      %s23 = sphi 0, %s25
      %s26 = sphi 0, %s23
      %s27 = sphi 0, %s26
      %s43 = sphi 0, %s27
      %s49 = sphi 0, %s51
      %s52 = sphi 0, %s49
      %s53 = sphi 0, %s52
      %s69 = sphi 0, %s53
      %s73 = sphi 0, %s73
      %s75 = sphi 0, %s73
      %s76 = sphi 0, %s75
      %s90 = sphi 0, %s76
      %s94 = sphi 0, %s94
      %s96 = sphi 0, %s94
      %s97 = sphi 0, %s96
      %s111 = sphi 0, %s97
      %s117 = sphi 0, %s119
      %s120 = sphi 0, %s117
      %s121 = sphi 0, %s120
      %s137 = sphi 0, %s121
    $region4: #{tpu_custom_call.1} parent=1 // loop_header_branch
      %16 = sbr.rel (%p14) target = $region8
    $region5: #{tpu_custom_call.1} parent=1 // loop_body
      %s18 = ssub.s32 %s13, 1
      %s19 = ssub.s32 %s13, 2
      %s20 = sadd.s32 %s13, 1
      %s21 = ssub.s32 %s13, %s20
      %p22 = scmp.eq.s32.totalorder %s21, 0
      %s24 = sadd.s32 %s23, 1
      %s25 = scalar_select %p22, %s23, %s24
      %p28 = pneg %p22
      %p29 = scmp.eq.s32.totalorder %s13, 1
      %p30 = por %p28, %p29
      %p31 = scmp.ne.s32.totalorder %s23, %s26
      %p32 = scmp.eq.s32.totalorder %s13, 0
      %p33 = por %p31, %p32
      %p34 = scmp.ne.s32.totalorder %s23, %s26
      %p35 = scmp.eq.s32.totalorder %s18, 1
      %p36 = por %p34, %p35
      %p37 = scmp.ne.s32.totalorder %s26, %s27
      %p38 = scmp.eq.s32.totalorder %s18, 0
      %p39 = por %p37, %p38
      %p40 = scmp.ne.s32.totalorder %s26, %s27
      %p41 = scmp.eq.s32.totalorder %s19, 1
      %p42 = por %p40, %p41
      %p44 = scmp.ne.s32.totalorder %s27, %s43
      %p45 = scmp.eq.s32.totalorder %s19, 0
      %p46 = por %p44, %p45
      %s47 = ssub.s32 %s13, %s20
      %p48 = scmp.eq.s32.totalorder %s47, 0
      %s50 = sadd.s32 %s49, 1
      %s51 = scalar_select %p48, %s49, %s50
      %p54 = pneg %p48
      %p55 = scmp.eq.s32.totalorder %s13, 1
      %p56 = por %p54, %p55
      %p57 = scmp.ne.s32.totalorder %s49, %s52
      %p58 = scmp.eq.s32.totalorder %s13, 0
      %p59 = por %p57, %p58
      %p60 = scmp.ne.s32.totalorder %s49, %s52
      %p61 = scmp.eq.s32.totalorder %s18, 1
      %p62 = por %p60, %p61
      %p63 = scmp.ne.s32.totalorder %s52, %s53
      %p64 = scmp.eq.s32.totalorder %s18, 0
      %p65 = por %p63, %p64
      %p66 = scmp.ne.s32.totalorder %s52, %s53
      %p67 = scmp.eq.s32.totalorder %s19, 1
      %p68 = por %p66, %p67
      %p70 = scmp.ne.s32.totalorder %s53, %s69
      %p71 = scmp.eq.s32.totalorder %s19, 0
      %p72 = por %p70, %p71
      %s74 = sadd.s32 %s73, 1
      %p77 = scmp.eq.s32.totalorder %s13, 1
      %p78 = scmp.ne.s32.totalorder %s73, %s75
      %p79 = scmp.eq.s32.totalorder %s13, 0
      %p80 = por %p78, %p79
      %p81 = scmp.ne.s32.totalorder %s73, %s75
      %p82 = scmp.eq.s32.totalorder %s18, 1
      %p83 = por %p81, %p82
      %p84 = scmp.ne.s32.totalorder %s75, %s76
      %p85 = scmp.eq.s32.totalorder %s18, 0
      %p86 = por %p84, %p85
      %p87 = scmp.ne.s32.totalorder %s75, %s76
      %p88 = scmp.eq.s32.totalorder %s19, 1
      %p89 = por %p87, %p88
      %p91 = scmp.ne.s32.totalorder %s76, %s90
      %p92 = scmp.eq.s32.totalorder %s19, 0
      %p93 = por %p91, %p92
      %s95 = sadd.s32 %s94, 1
      %p98 = scmp.eq.s32.totalorder %s13, 1
      %p99 = scmp.ne.s32.totalorder %s94, %s96
      %p100 = scmp.eq.s32.totalorder %s13, 0
      %p101 = por %p99, %p100
      %p102 = scmp.ne.s32.totalorder %s94, %s96
      %p103 = scmp.eq.s32.totalorder %s18, 1
      %p104 = por %p102, %p103
      %p105 = scmp.ne.s32.totalorder %s96, %s97
      %p106 = scmp.eq.s32.totalorder %s18, 0
      %p107 = por %p105, %p106
      %p108 = scmp.ne.s32.totalorder %s96, %s97
      %p109 = scmp.eq.s32.totalorder %s19, 1
      %p110 = por %p108, %p109
      %p112 = scmp.ne.s32.totalorder %s97, %s111
      %p113 = scmp.eq.s32.totalorder %s19, 0
      %p114 = por %p112, %p113
      %s115 = ssub.s32 %s13, %s20
      %p116 = scmp.eq.s32.totalorder %s115, 0
      %s118 = sadd.s32 %s117, 1
      %s119 = scalar_select %p116, %s117, %s118
      %p122 = pneg %p116
      %p123 = scmp.eq.s32.totalorder %s13, 1
      %p124 = por %p122, %p123
      %p125 = scmp.ne.s32.totalorder %s117, %s120
      %p126 = scmp.eq.s32.totalorder %s13, 0
      %p127 = por %p125, %p126
      %p128 = scmp.ne.s32.totalorder %s117, %s120
      %p129 = scmp.eq.s32.totalorder %s18, 1
      %p130 = por %p128, %p129
      %p131 = scmp.ne.s32.totalorder %s120, %s121
      %p132 = scmp.eq.s32.totalorder %s18, 0
      %p133 = por %p131, %p132
      %p134 = scmp.ne.s32.totalorder %s120, %s121
      %p135 = scmp.eq.s32.totalorder %s19, 1
      %p136 = por %p134, %p135
      %p138 = scmp.ne.s32.totalorder %s121, %s137
      %p139 = scmp.eq.s32.totalorder %s19, 0
      %p140 = por %p138, %p139
      %p141 = scmp.le.s32.totalorder 1, %s13
      %p142 = scmp.lt.s32.totalorder %s13, 3
      %p143 = pnand %p141, %p142
      %p144 = pneg %p143
      // Predicated region
      $region9: #{tpu_custom_call.1} parent=5 // pred_check
        _
      $region10: #{tpu_custom_call.1} parent=5 // pred_check_branch
        %146 = sbr.rel (%p143) target = $region12
      $region11: #{tpu_custom_call.1} parent=5 // pred_region
        %s147 = ssub.s32 %s13, 1
        // Predicated region
        $region13: #{tpu_custom_call.1} parent=11 // pred_check
          %p148 = pneg %p86
        $region14: #{tpu_custom_call.1} parent=11 // pred_check_branch
          %150 = sbr.rel (%p148) target = $region16
        $region15: #{tpu_custom_call.1} parent=11 // pred_region
          _
        $region16: #{tpu_custom_call.1} parent=11 // pred_fallthru
          _
        // Predicated region
        $region17: #{tpu_custom_call.1} parent=11 // pred_check
          %p151 = pneg %p107
        $region18: #{tpu_custom_call.1} parent=11 // pred_check_branch
          %153 = sbr.rel (%p151) target = $region20
        $region19: #{tpu_custom_call.1} parent=11 // pred_region
          _
        $region20: #{tpu_custom_call.1} parent=11 // pred_fallthru
          _
      $region12: #{tpu_custom_call.1} parent=5 // pred_fallthru
        _
      %p154 = scmp.lt.s32.totalorder %s13, 2
      // Predicated region
      $region21: #{tpu_custom_call.1} parent=5 // pred_check
        %p155 = pneg %p154
      $region22: #{tpu_custom_call.1} parent=5 // pred_check_branch
        %157 = sbr.rel (%p155) target = $region24
      $region23: #{tpu_custom_call.1} parent=5 // pred_region
        // Predicated region
        $region25: #{tpu_custom_call.1} parent=23 // pred_check
          %p158 = pneg %p33
        $region26: #{tpu_custom_call.1} parent=23 // pred_check_branch
          %160 = sbr.rel (%p158) target = $region28
        $region27: #{tpu_custom_call.1} parent=23 // pred_region
          %p161 = scmp.lt.s32.totalorder %s13, 1
          %s162 = scalar_select %p161, %s13, 1
          %s163 = smul.addr %s162, 8
          %s164 = scalar_lea.vmem %s0, %s163
        $region28: #{tpu_custom_call.1} parent=23 // pred_fallthru
          _
        // Predicated region
        $region29: #{tpu_custom_call.1} parent=23 // pred_check
          %p165 = pneg %p59
        $region30: #{tpu_custom_call.1} parent=23 // pred_check_branch
          %167 = sbr.rel (%p165) target = $region32
        $region31: #{tpu_custom_call.1} parent=23 // pred_region
          %p168 = scmp.lt.s32.totalorder %s13, 1
          %s169 = scalar_select %p168, %s13, 1
          %s170 = smul.addr %s169, 8
          %s171 = scalar_lea.vmem %s1, %s170
        $region32: #{tpu_custom_call.1} parent=23 // pred_fallthru
          _
      $region24: #{tpu_custom_call.1} parent=5 // pred_fallthru
        _
      %p172 = scmp.le.s32.totalorder 1, %s13
      %p173 = scmp.lt.s32.totalorder %s13, 3
      %p174 = pnand %p172, %p173
      %p175 = pneg %p174
      // Predicated region
      $region33: #{tpu_custom_call.1} parent=5 // pred_check
        _
      $region34: #{tpu_custom_call.1} parent=5 // pred_check_branch
        %177 = sbr.rel (%p174) target = $region36
      $region35: #{tpu_custom_call.1} parent=5 // pred_region
        %s178 = ssub.s32 %s13, 1
        %p179 = scmp.lt.s32.totalorder %s18, 1
        %s180 = scalar_select %p179, %s18, 1
        %s181 = smul.addr %s180, 8
        %s182 = scalar_lea.vmem %s0, %s181
        %p183 = pneg %p39
        %p184 = pneg %p36
        %p185 = scmp.lt.s32.totalorder %s18, 1
        %s186 = scalar_select %p185, %s18, 1
        %s187 = smul.addr %s186, 8
        %s188 = scalar_lea.vmem %s1, %s187
        %p189 = pneg %p65
        %p190 = pneg %p62
        %p191 = pneg %p86
        %p192 = pneg %p83
        %p193 = pneg %p107
        %p194 = pneg %p104
        %p195 = pneg %p133
        %p196 = pneg %p130
        %s197 = sand.u32 %s120, 1
        %s198 = scalar_lea.sflag [#allocation3], %s197
        %s199 = sand.u32 %s120, 1
        %s200 = smul.addr %s199, 8
        %s201 = scalar_lea.vmem [#allocation2], %s200
        %p202 = scmp.lt.s32.totalorder %s18, 1
        %s203 = scalar_select %p202, %s18, 1
        %s204 = smul.addr %s203, 8
        %s205 = scalar_lea.vmem %s0, %s204
        %p206 = scmp.lt.s32.totalorder %s18, 1
        %s207 = scalar_select %p206, %s18, 1
        %s208 = smul.addr %s207, 8
        %s209 = scalar_lea.vmem %s1, %s208
        %v210 = vld [vmem:[%s205] sm:$0xff]
        %v211 = vld [vmem:[%s2] sm:$0xff]
        %v212 = vld [vmem:[%s2 + $0x8] sm:$0xff]
        %v213 = vld [vmem:[%s2 + $0x10] sm:$0xff]
        %v214 = vld [vmem:[%s2 + $0x18] sm:$0xff]
        %vm215 = vcmask 261120
        %v217 = vsel %vm215, %v210, 0
        %219 = vmatprep.subr.mxu0 0.0
        %220 = vmatpush1.msra.mxu0 %v211
        %221 = vmatprep.subr.mxu0 0.0
        %222 = vmatpush1.msra.mxu0 %v212
        %223 = vmatprep.subr.mxu0 0.0
        %224 = vmatpush1.msra.mxu0 %v213
        %225 = vmatprep.subr.mxu0 0.0
        %226 = vmatpush1.msra.mxu0 %v214
        %227 = vmatprep.subr.mxu0 0.0
        %228 = vmatpush1.msra.mxu0 0.0
        %229 = vmatprep.subr.mxu0 0.0
        %230 = vmatpush1.msra.mxu0 0.0
        %231 = vmatprep.subr.mxu0 0.0
        %232 = vmatpush1.msra.mxu0 0.0
        %233 = vmatprep.subr.mxu0 0.0
        %234 = vmatpush1.msra.mxu0 0.0
        %235 = vmatprep.subr.mxu0 0.0
        %236 = vmatpush1.msra.mxu0 0.0
        %237 = vmatprep.subr.mxu0 0.0
        %238 = vmatpush1.msra.mxu0 0.0
        %239 = vmatprep.subr.mxu0 0.0
        %240 = vmatpush1.msra.mxu0 0.0
        %241 = vmatprep.subr.mxu0 0.0
        %242 = vmatpush1.msra.mxu0 0.0
        %243 = vmatprep.subr.mxu0 0.0
        %244 = vmatpush1.msra.mxu0 0.0
        %245 = vmatprep.subr.mxu0 0.0
        %246 = vmatpush1.msra.mxu0 0.0
        %247 = vmatprep.subr.mxu0 0.0
        %248 = vmatpush1.msra.mxu0 0.0
        %249 = vmatprep.subr.mxu0 0.0
        %250 = vmatpush1.msra.mxu0 0.0
        %251 = vmatprep.subr.mxu0 0.0
        %252 = vmatpush1.msra.mxu0 0.0
        %253 = vmatprep.subr.mxu0 0.0
        %254 = vmatpush1.msra.mxu0 0.0
        %255 = vmatprep.subr.mxu0 0.0
        %256 = vmatpush1.msra.mxu0 0.0
        %257 = vmatprep.subr.mxu0 0.0
        %258 = vmatpush1.msra.mxu0 0.0
        %259 = vmatprep.subr.mxu0 0.0
        %260 = vmatpush1.msra.mxu0 0.0
        %261 = vmatprep.subr.mxu0 0.0
        %262 = vmatpush1.msra.mxu0 0.0
        %263 = vmatprep.subr.mxu0 0.0
        %264 = vmatpush1.msra.mxu0 0.0
        %265 = vmatprep.subr.mxu0 0.0
        %266 = vmatpush1.msra.mxu0 0.0
        %267 = vmatprep.subr.mxu0 0.0
        %268 = vmatpush1.msra.mxu0 0.0
        %269 = vmatprep.subr.mxu0 0.0
        %270 = vmatpush1.msra.mxu0 0.0
        %271 = vmatprep.subr.mxu0 0.0
        %272 = vmatpush1.msra.mxu0 0.0
        %273 = vmatprep.subr.mxu0 0.0
        %274 = vmatpush1.msra.mxu0 0.0
        %275 = vmatprep.subr.mxu0 0.0
        %276 = vmatpush1.msra.mxu0 0.0
        %277 = vmatprep.subr.mxu0 0.0
        %278 = vmatpush1.msra.mxu0 0.0
        %279 = vmatprep.subr.mxu0 0.0
        %280 = vmatpush1.msra.mxu0 0.0
        %281 = vmatprep.subr.mxu0 0.0
        %282 = vmatpush1.msra.mxu0 0.0
        %283 = vmatprep.mubr.f32.mxu0 0.0
        %284 = vmatmul.mubr.f32.gmra.mrb[0].mxu0 %v217
        %v285 = vpop.f32.mrb[0].mxu0
        %v286 = vadd.f32 0.0, %v285
        %v287 = vpop.f32.mrb[0].mxu0
        %288 = vdwg.mxu0
        %v289 = vld [vmem:[%s209] sm:$0xff]
        %v290 = vld [vmem:[%s3] sm:$0xff]
        %v291 = vld [vmem:[%s3 + $0x8] sm:$0xff]
        %v292 = vld [vmem:[%s3 + $0x10] sm:$0xff]
        %v293 = vld [vmem:[%s3 + $0x18] sm:$0xff]
        %v294 = vld [vmem:[%s3 + $0x20] sm:$0xff]
        %v295 = vld [vmem:[%s3 + $0x28] sm:$0xff]
        %v296 = vld [vmem:[%s3 + $0x30] sm:$0xff]
        %v297 = vld [vmem:[%s3 + $0x38] sm:$0xff]
        %v298 = vld [vmem:[%s3 + $0x40] sm:$0xff]
        %v299 = vld [vmem:[%s3 + $0x48] sm:$0xff]
        %v300 = vld [vmem:[%s3 + $0x50] sm:$0xff]
        %v301 = vld [vmem:[%s3 + $0x58] sm:$0xff]
        %v302 = vld [vmem:[%s3 + $0x60] sm:$0xff]
        %v303 = vld [vmem:[%s3 + $0x68] sm:$0xff]
        %v304 = vld [vmem:[%s3 + $0x70] sm:$0xff]
        %v305 = vld [vmem:[%s3 + $0x78] sm:$0xff]
        %306 = vmatprep.subr.mxu0 0.0
        %307 = vmatpush1.msra.mxu0 %v290
        %308 = vmatprep.subr.mxu0 0.0
        %309 = vmatpush1.msra.mxu0 %v291
        %310 = vmatprep.subr.mxu0 0.0
        %311 = vmatpush1.msra.mxu0 %v292
        %312 = vmatprep.subr.mxu0 0.0
        %313 = vmatpush1.msra.mxu0 %v293
        %314 = vmatprep.subr.mxu0 0.0
        %315 = vmatpush1.msra.mxu0 %v294
        %316 = vmatprep.subr.mxu0 0.0
        %317 = vmatpush1.msra.mxu0 %v295
        %318 = vmatprep.subr.mxu0 0.0
        %319 = vmatpush1.msra.mxu0 %v296
        %320 = vmatprep.subr.mxu0 0.0
        %321 = vmatpush1.msra.mxu0 %v297
        %322 = vmatprep.subr.mxu0 0.0
        %323 = vmatpush1.msra.mxu0 %v298
        %324 = vmatprep.subr.mxu0 0.0
        %325 = vmatpush1.msra.mxu0 %v299
        %326 = vmatprep.subr.mxu0 0.0
        %327 = vmatpush1.msra.mxu0 %v300
        %328 = vmatprep.subr.mxu0 0.0
        %329 = vmatpush1.msra.mxu0 %v301
        %330 = vmatprep.subr.mxu0 0.0
        %331 = vmatpush1.msra.mxu0 %v302
        %332 = vmatprep.subr.mxu0 0.0
        %333 = vmatpush1.msra.mxu0 %v303
        %334 = vmatprep.subr.mxu0 0.0
        %335 = vmatpush1.msra.mxu0 %v304
        %336 = vmatprep.subr.mxu0 0.0
        %337 = vmatpush1.msra.mxu0 %v305
        %338 = vmatprep.subr.mxu0 0.0
        %339 = vmatpush1.msra.mxu0 0.0
        %340 = vmatprep.subr.mxu0 0.0
        %341 = vmatpush1.msra.mxu0 0.0
        %342 = vmatprep.subr.mxu0 0.0
        %343 = vmatpush1.msra.mxu0 0.0
        %344 = vmatprep.subr.mxu0 0.0
        %345 = vmatpush1.msra.mxu0 0.0
        %346 = vmatprep.subr.mxu0 0.0
        %347 = vmatpush1.msra.mxu0 0.0
        %348 = vmatprep.subr.mxu0 0.0
        %349 = vmatpush1.msra.mxu0 0.0
        %350 = vmatprep.subr.mxu0 0.0
        %351 = vmatpush1.msra.mxu0 0.0
        %352 = vmatprep.subr.mxu0 0.0
        %353 = vmatpush1.msra.mxu0 0.0
        %354 = vmatprep.subr.mxu0 0.0
        %355 = vmatpush1.msra.mxu0 0.0
        %356 = vmatprep.subr.mxu0 0.0
        %357 = vmatpush1.msra.mxu0 0.0
        %358 = vmatprep.subr.mxu0 0.0
        %359 = vmatpush1.msra.mxu0 0.0
        %360 = vmatprep.subr.mxu0 0.0
        %361 = vmatpush1.msra.mxu0 0.0
        %362 = vmatprep.subr.mxu0 0.0
        %363 = vmatpush1.msra.mxu0 0.0
        %364 = vmatprep.subr.mxu0 0.0
        %365 = vmatpush1.msra.mxu0 0.0
        %366 = vmatprep.subr.mxu0 0.0
        %367 = vmatpush1.msra.mxu0 0.0
        %368 = vmatprep.subr.mxu0 0.0
        %369 = vmatpush1.msra.mxu0 0.0
        %370 = vmatprep.mubr.f32.mxu0 0.0
        %371 = vmatmul.mubr.f32.gmra.mrb[0].mxu0 %v289
        %v372 = vpop.f32.mrb[0].mxu0
        %v373 = vadd.f32 0.0, %v372
        %v374 = vpop.f32.mrb[0].mxu0
        %375 = vdwg.mxu0
        %v376 = vsub.f32 %v286, %v373
        %377 = vst.msk [vmem:[%s201] sm:$0xff] %vm215, %v376
        %s378 = sand.u32 %s120, 1
        %s379 = scalar_lea.sflag [#allocation3], %s378
        %s380 = sand.u32 %s120, 1
        %s381 = smul.addr %s380, 8
        %s382 = scalar_lea.vmem [#allocation2], %s381
        // Predicated region
        $region37: #{tpu_custom_call.1} parent=35 // pred_check
          %p383 = pneg %p130
        $region38: #{tpu_custom_call.1} parent=35 // pred_check_branch
          %385 = sbr.rel (%p383) target = $region40
        $region39: #{tpu_custom_call.1} parent=35 // pred_region
          %s387 = ssub.s32 128, 128
          %388 = vsyncadd %s379, %s387
          %s389 = smul.addr %s18, 128
          %s390 = scalar_lea.hbm %s4, %s389
          %s392 = sshll.u32 %s382, 4
          %s393 = int_to_ptr.vmem [resolvable:$true] %s392
          %395 = dma.vmem_to_hbm [thread:$0]  %s393, 128, %s390, %s379
        $region40: #{tpu_custom_call.1} parent=35 // pred_fallthru
          _
      $region36: #{tpu_custom_call.1} parent=5 // pred_fallthru
        _
      %p396 = scmp.le.s32.totalorder 2, %s13
      // Predicated region
      $region41: #{tpu_custom_call.1} parent=5 // pred_check
        %p397 = pneg %p396
      $region42: #{tpu_custom_call.1} parent=5 // pred_check_branch
        %399 = sbr.rel (%p397) target = $region44
      $region43: #{tpu_custom_call.1} parent=5 // pred_region
        %s400 = ssub.s32 %s13, 2
        // Predicated region
        $region45: #{tpu_custom_call.1} parent=43 // pred_check
          %p401 = pneg %p136
        $region46: #{tpu_custom_call.1} parent=43 // pred_check_branch
          %403 = sbr.rel (%p401) target = $region48
        $region47: #{tpu_custom_call.1} parent=43 // pred_region
          %s404 = sand.u32 %s121, 1
          %s405 = scalar_lea.sflag [#allocation3], %s404
          %s406 = sand.u32 %s121, 1
          %s407 = smul.addr %s406, 8
          %s408 = scalar_lea.vmem [#allocation2], %s407
          %409 = dma.done %s405, 128
        $region48: #{tpu_custom_call.1} parent=43 // pred_fallthru
          _
      $region44: #{tpu_custom_call.1} parent=5 // pred_fallthru
        _
    $region6: #{tpu_custom_call.1} parent=1 // loop_footer
      %s17 = sadd.s32 1, %s13
    $region7: #{tpu_custom_call.1} parent=1 // loop_footer_branch
      %12 = sbr.rel target = $region3
    $region8: #{tpu_custom_call.1} parent=1 // loop_exit
      _
    %410 = vsyncpa [#allocation3], 1
    %s411 = scalar_lea.sflag [#allocation3], 1
    %412 = vsyncpa %s411, 1

</llo_original>
